<compile_context>
chip_gen: v5e
topology: v5e:2x2
jax: 0.10.0
libtpu: 0.0.40
codegen_flags: <defaults>
</compile_context>

<pallas_src>
import jax
import jax.numpy as jnp
from jax.experimental import pallas as pl
from jax.experimental.pallas import tpu as pltpu


_LANES = 128
_OUT_ROWS = 8  # rows 0..3 carry partial sums; rows 4..7 are zero (8-sublane aligned)


def _round_up(x, m):
    return ((x + m - 1) // m) * m


def _bce_dice_partials_kernel(o_ref, m_ref, out_ref):
    """Per-block per-lane partial sums.

    out tile (8, 128) rows:
      0: sum_rows(o * m)        (intersection)
      1: sum_rows(o * o)        (den1)
      2: sum_rows(m * m)        (den2)
      3: sum_rows(BCE term)     (un-normalized binary cross-entropy)
      4..7: zeros
    """
    o = o_ref[...].astype(jnp.float32)  # (TR, 128)
    m = m_ref[...].astype(jnp.float32)

    s_om = jnp.sum(o * m, axis=0, keepdims=True)  # (1, 128)
    s_oo = jnp.sum(o * o, axis=0, keepdims=True)
    s_mm = jnp.sum(m * m, axis=0, keepdims=True)

    # PyTorch BCELoss: clamp log terms at -100 (also makes the zero padding
    # contribute exactly 0 here).
    log_o = jnp.maximum(jnp.log(o), jnp.float32(-100.0))
    log_1mo = jnp.maximum(jnp.log(1.0 - o), jnp.float32(-100.0))
    bce = -(m * log_o + (1.0 - m) * log_1mo)
    s_bce = jnp.sum(bce, axis=0, keepdims=True)

    zeros = jnp.zeros((_OUT_ROWS - 4, _LANES), jnp.float32)
    out_ref[0] = jnp.concatenate([s_om, s_oo, s_mm, s_bce, zeros], axis=0)


def bce_dice_loss(output, mask, *, rows_per_block=2048):
    """Forward pass of BCE_DICELoss: 1 - dice + BCE(output, mask)."""
    total = output.size
    o_flat = output.reshape(-1).astype(jnp.float32)
    m_flat = mask.reshape(-1).astype(jnp.float32)

    rows = pl.cdiv(total, _LANES)
    tr = min(rows_per_block, _round_up(rows, 8))      # rows per block (multiple of 8)
    rows_padded = _round_up(rows, tr)
    pad = rows_padded * _LANES - total
    if pad:
        # Zero padding contributes 0 to all four partial sums.
        o_flat = jnp.pad(o_flat, (0, pad))
        m_flat = jnp.pad(m_flat, (0, pad))
    o2 = o_flat.reshape(rows_padded, _LANES)
    m2 = m_flat.reshape(rows_padded, _LANES)
    num_blocks = rows_padded // tr

    in_spec = pl.BlockSpec((tr, _LANES), lambda i: (i, 0))
    partials = pl.pallas_call(
        _bce_dice_partials_kernel,
        out_shape=jax.ShapeDtypeStruct((num_blocks, _OUT_ROWS, _LANES), jnp.float32),
        grid_spec=pltpu.PrefetchScalarGridSpec(
            num_scalar_prefetch=0,
            grid=(num_blocks,),
            in_specs=[in_spec, in_spec],
            out_specs=pl.BlockSpec((1, _OUT_ROWS, _LANES), lambda i: (i, 0, 0)),
        ),
        compiler_params=pltpu.CompilerParams(
            dimension_semantics=("parallel",),
            vmem_limit_bytes=32 * 1024 * 1024,
        ),
    )(o2, m2)

    # Final cross-block / cross-lane reduce + scalar epilogue in plain JAX.
    sums = jnp.sum(partials, axis=(0, 2))  # (8,)
    s_om, s_oo, s_mm, s_bce = sums[0], sums[1], sums[2], sums[3]

    eps = jnp.float32(1e-8)
    dice = 2.0 * ((s_om + eps) / (s_oo + s_mm + eps))
    bce = s_bce / jnp.float32(total)
    loss = 1.0 - dice + bce
    return loss


def _reference_loss(o, m):
    """Pure-JAX reference mirroring the PyTorch BCE_DICELoss forward."""
    eps = 1e-8
    intersection = jnp.sum(o * m)
    den1 = jnp.sum(o * o)
    den2 = jnp.sum(m * m)
    dice = 2.0 * ((intersection + eps) / (den1 + den2 + eps))
    log_o = jnp.maximum(jnp.log(o), -100.0)
    log_1mo = jnp.maximum(jnp.log(1.0 - o), -100.0)
    bce = jnp.mean(-(m * log_o + (1.0 - m) * log_1mo))
    return 1.0 - dice + bce


if __name__ == "__main__":
    key = jax.random.PRNGKey(0)
    k1, k2 = jax.random.split(key, 2)

    N, C, H, W = 2, 4, 16, 16
    output = jax.random.uniform(k1, (N, C, H, W), dtype=jnp.float32)                # probabilities in [0, 1)
    mask = jax.random.bernoulli(k2, 0.5, (N, C, H, W)).astype(jnp.float32)          # binary mask

    loss = jax.block_until_ready(bce_dice_loss(output, mask))
    ref = _reference_loss(output, mask)

    assert jnp.isfinite(loss), loss
    assert jnp.allclose(loss, ref, rtol=1e-5, atol=1e-6), (loss, ref)

    print("KERNEL_OK")
</pallas_src>

<mosaic_0001>
module attributes {stable_mosaic.version = 11 : i64} {
  func.func @_bce_dice_partials_kernel(%arg0: i32, %arg1: memref<16x128xf32, #tpu.memory_space<vmem>>, %arg2: memref<16x128xf32, #tpu.memory_space<vmem>>, %arg3: memref<1x8x128xf32, #tpu.memory_space<vmem>>) attributes {dimension_semantics = [#tpu.dimension_semantics<parallel>], iteration_bounds = array<i64: 1>, scalar_prefetch = 0 : i64, scratch_operands = 0 : i64, tpu.core_type = #tpu.core_type<tc>, window_params = [{transform_indices = @transform_0, window_bounds = array<i64: 16, 128>}, {transform_indices = @transform_1, window_bounds = array<i64: 16, 128>}, {transform_indices = @transform_2, window_bounds = array<i64: 1, 8, 128>}]} {
    %c0 = arith.constant 0 : index
    %c0_0 = arith.constant 0 : index
    %0 = vector.load %arg1[%c0, %c0_0] : memref<16x128xf32, #tpu.memory_space<vmem>>, vector<16x128xf32>
    %c0_1 = arith.constant 0 : index
    %c0_2 = arith.constant 0 : index
    %1 = vector.load %arg2[%c0_1, %c0_2] : memref<16x128xf32, #tpu.memory_space<vmem>>, vector<16x128xf32>
    %2 = arith.mulf %0, %1 : vector<16x128xf32>
    %cst = arith.constant dense<0.000000e+00> : vector<128xf32>
    %3 = vector.multi_reduction <add>, %2, %cst [0] : vector<16x128xf32> to vector<128xf32>
    %4 = vector.shape_cast %3 : vector<128xf32> to vector<1x128xf32>
    %5 = arith.mulf %0, %0 : vector<16x128xf32>
    %cst_3 = arith.constant dense<0.000000e+00> : vector<128xf32>
    %6 = vector.multi_reduction <add>, %5, %cst_3 [0] : vector<16x128xf32> to vector<128xf32>
    %7 = vector.shape_cast %6 : vector<128xf32> to vector<1x128xf32>
    %8 = arith.mulf %1, %1 : vector<16x128xf32>
    %cst_4 = arith.constant dense<0.000000e+00> : vector<128xf32>
    %9 = vector.multi_reduction <add>, %8, %cst_4 [0] : vector<16x128xf32> to vector<128xf32>
    %10 = vector.shape_cast %9 : vector<128xf32> to vector<1x128xf32>
    %11 = math.log %0 : vector<16x128xf32>
    %cst_5 = arith.constant -1.000000e+02 : f32
    %12 = vector.broadcast %cst_5 : f32 to vector<16x128xf32>
    %13 = arith.maximumf %11, %12 : vector<16x128xf32>
    %cst_6 = arith.constant 1.000000e+00 : f32
    %14 = vector.broadcast %cst_6 : f32 to vector<16x128xf32>
    %15 = arith.subf %14, %0 : vector<16x128xf32>
    %16 = math.log %15 : vector<16x128xf32>
    %cst_7 = arith.constant -1.000000e+02 : f32
    %17 = vector.broadcast %cst_7 : f32 to vector<16x128xf32>
    %18 = arith.maximumf %16, %17 : vector<16x128xf32>
    %19 = arith.mulf %1, %13 : vector<16x128xf32>
    %cst_8 = arith.constant 1.000000e+00 : f32
    %20 = vector.broadcast %cst_8 : f32 to vector<16x128xf32>
    %21 = arith.subf %20, %1 : vector<16x128xf32>
    %22 = arith.mulf %21, %18 : vector<16x128xf32>
    %23 = arith.addf %19, %22 : vector<16x128xf32>
    %cst_9 = arith.constant 0.000000e+00 : f32
    %24 = vector.broadcast %cst_9 : f32 to vector<16x128xf32>
    %25 = arith.subf %24, %23 : vector<16x128xf32>
    %cst_10 = arith.constant dense<0.000000e+00> : vector<128xf32>
    %26 = vector.multi_reduction <add>, %25, %cst_10 [0] : vector<16x128xf32> to vector<128xf32>
    %27 = vector.shape_cast %26 : vector<128xf32> to vector<1x128xf32>
    %cst_11 = arith.constant 0.000000e+00 : f32
    %28 = vector.broadcast %cst_11 : f32 to vector<4x128xf32>
    %29 = tpu.concatenate %4, %7, %10, %27, %28 in 0 : vector<1x128xf32>, vector<1x128xf32>, vector<1x128xf32>, vector<1x128xf32>, vector<4x128xf32> -> vector<8x128xf32>
    %c0_12 = arith.constant 0 : index
    %c0_13 = arith.constant 0 : index
    %c0_14 = arith.constant 0 : index
    %30 = vector.load %arg3[%c0_12, %c0_13, %c0_14] : memref<1x8x128xf32, #tpu.memory_space<vmem>>, vector<1x8x128xf32>
    %31 = vector.shape_cast %30 : vector<1x8x128xf32> to vector<8x128xf32>
    %32 = vector.shape_cast %29 : vector<8x128xf32> to vector<1x8x128xf32>
    tpu.vector_store %arg3[%c0_12, %c0_13, %c0_14], %32 {strides = array<i32>} : memref<1x8x128xf32, #tpu.memory_space<vmem>>, vector<1x8x128xf32>,
    return
  }
  func.func @transform_0(%arg0: i32) -> (i32, i32) {
    %c0_i32 = arith.constant 0 : i32
    %c0_i32_0 = arith.constant 0 : i32
    return %arg0, %c0_i32 : i32, i32
  }
  func.func @transform_1(%arg0: i32) -> (i32, i32) {
    %c0_i32 = arith.constant 0 : i32
    %c0_i32_0 = arith.constant 0 : i32
    return %arg0, %c0_i32 : i32, i32
  }
  func.func @transform_2(%arg0: i32) -> (i32, i32, i32) {
    %c0_i32 = arith.constant 0 : i32
    %c0_i32_0 = arith.constant 0 : i32
    %c0_i32_1 = arith.constant 0 : i32
    return %arg0, %c0_i32, %c0_i32_0 : i32, i32, i32
  }
}

</mosaic_0001>

<llo_original>
// kernel: tpu_custom_call.1
$region0: #{tpu_custom_call.1}
  #allocation0 [shape = 'u32[]', space=smem, size = 0x4, offset = 0x4, fixed_abs, tag = 'smem constant byte address 0x4 - core index']
  #allocation1 [shape = 'u32[72,128]{1,0:T(1,128)}', space=vmem, size = 0x9000, scoped, tag = 'internal scratch']
  %s0 = inlined_call_operand.hbm [shape: f32[16,128], index: 0, kind: input, shape index: {}]
  %s1 = inlined_call_operand.hbm [shape: f32[16,128], index: 1, kind: input, shape index: {}]
  %s2 = inlined_call_operand.hbm [shape: f32[1,8,128], index: 2, kind: output, shape index: {}]
  %s3 = sld [smem:[#allocation0]]
  $region26: #{tpu_custom_call.1} parent=0
    _
  %s5 = ssub.s32 1, %s3
  %s6 = scalar_select 0, %s5, %s3
  $region1: #{tpu_custom_call.1} parent=0
    #allocation2 [shape = 'u8[8192]{0}', space=vmem, size = 0x2000, scoped, tag = 'input window, operand 0, single buffered']
    #allocation3 [shape = 's32[1]{0}', space=sflag, size = 0x4, scoped, tag = 'scoped memory for tpu_custom_call.1']
    #allocation4 [shape = 's32[1]{0}', space=sflag, size = 0x4, scoped, tag = 'scoped memory for tpu_custom_call.1']
    #allocation5 [shape = 'u8[8192]{0}', space=vmem, size = 0x2000, scoped, tag = 'input window, operand 1, single buffered']
    #allocation6 [shape = 's32[1]{0}', space=sflag, size = 0x4, scoped, tag = 'scoped memory for tpu_custom_call.1']
    #allocation7 [shape = 'u8[4096]{0}', space=vmem, size = 0x1000, scoped, tag = 'output window, operand 0, single buffered']
    %7 = vsyncpa [#allocation3], 0
    %8 = vsyncpa [#allocation6], 0
    %9 = vsyncpa [#allocation4], 0
    // Predicated region
    $region2: #{tpu_custom_call.1} parent=1 // pred_check
      _
    $region3: #{tpu_custom_call.1} parent=1 // pred_check_branch
      %11 = sbr.rel (0) target = $region5
    $region4: #{tpu_custom_call.1} parent=1 // pred_region
      %13 = vsyncadd [#allocation3], 0
      %s14 = sshll.u32 %s0, 4
      %s15 = int_to_ptr.hbm [resolvable:$true] %s14
      %s16 = sshll.u32 [#allocation2], 4
      %s17 = int_to_ptr.vmem [resolvable:$true] %s16
      %22 = dma.hbm_to_vmem [thread:$0]  %s15, 256, %s17, [#allocation3], 128, 128, 8
    $region5: #{tpu_custom_call.1} parent=1 // pred_fallthru
      _
    // Predicated region
    $region6: #{tpu_custom_call.1} parent=1 // pred_check
      _
    $region7: #{tpu_custom_call.1} parent=1 // pred_check_branch
      %24 = sbr.rel (0) target = $region9
    $region8: #{tpu_custom_call.1} parent=1 // pred_region
      %26 = vsyncadd [#allocation6], 0
      %s27 = sshll.u32 %s1, 4
      %s28 = int_to_ptr.hbm [resolvable:$true] %s27
      %s29 = sshll.u32 [#allocation5], 4
      %s30 = int_to_ptr.vmem [resolvable:$true] %s29
      %35 = dma.hbm_to_vmem [thread:$0]  %s28, 256, %s30, [#allocation6], 128, 128, 8
    $region9: #{tpu_custom_call.1} parent=1 // pred_fallthru
      _
    // Predicated region
    $region10: #{tpu_custom_call.1} parent=1 // pred_check
      _
    $region11: #{tpu_custom_call.1} parent=1 // pred_check_branch
      %37 = sbr.rel (0) target = $region13
    $region12: #{tpu_custom_call.1} parent=1 // pred_region
      %39 = dma.done [#allocation3], 256
    $region13: #{tpu_custom_call.1} parent=1 // pred_fallthru
      _
    // Predicated region
    $region14: #{tpu_custom_call.1} parent=1 // pred_check
      _
    $region15: #{tpu_custom_call.1} parent=1 // pred_check_branch
      %41 = sbr.rel (0) target = $region17
    $region16: #{tpu_custom_call.1} parent=1 // pred_region
      %43 = dma.done [#allocation6], 256
    $region17: #{tpu_custom_call.1} parent=1 // pred_fallthru
      _
    %v44 = vld [vmem:[#allocation2] sm:$0xff]
    %v45 = vld [vmem:[#allocation2 + $0x8] sm:$0xff]
    %v46 = vld [vmem:[#allocation5] sm:$0xff]
    %v47 = vld [vmem:[#allocation5 + $0x8] sm:$0xff]
    %v48 = vmul.f32 %v44, %v46
    %v49 = vmul.f32 %v45, %v47
    %v50 = vadd.f32 %v48, %v49
    %v51 = vrot.slane %v50, 4
    %v52 = vadd.f32 %v50, %v51
    %v53 = vrot.slane %v52, 2
    %v54 = vadd.f32 %v52, %v53
    %v55 = vrot.slane %v54, 1
    %v56 = vadd.f32 %v54, %v55
    %v57 = vmul.f32 %v44, %v44
    %v58 = vmul.f32 %v45, %v45
    %v59 = vadd.f32 %v57, %v58
    %v60 = vrot.slane %v59, 4
    %v61 = vadd.f32 %v59, %v60
    %v62 = vrot.slane %v61, 2
    %v63 = vadd.f32 %v61, %v62
    %v64 = vrot.slane %v63, 1
    %v65 = vadd.f32 %v63, %v64
    %v66 = vmul.f32 %v46, %v46
    %v67 = vmul.f32 %v47, %v47
    %v68 = vadd.f32 %v66, %v67
    %v69 = vrot.slane %v68, 4
    %v70 = vadd.f32 %v68, %v69
    %v71 = vrot.slane %v70, 2
    %v72 = vadd.f32 %v70, %v71
    %v73 = vrot.slane %v72, 1
    %v74 = vadd.f32 %v72, %v73
    %v75 = vlog2.pop %v44
    %v76 = vmul.f32 %v75, 0.6931472
    %v77 = vlog2.pop %v45
    %v78 = vmul.f32 %v77, 0.6931472
    %v79 = vmax.f32 %v76, -100.0
    %v80 = vmax.f32 %v78, -100.0
    %v81 = vsub.f32 1.0, %v44
    %v82 = vsub.f32 1.0, %v45
    %v83 = vlog2.pop %v81
    %v84 = vmul.f32 %v83, 0.6931472
    %v85 = vlog2.pop %v82
    %v86 = vmul.f32 %v85, 0.6931472
    %v87 = vmax.f32 %v84, -100.0
    %v88 = vmax.f32 %v86, -100.0
    %v89 = vmul.f32 %v46, %v79
    %v90 = vmul.f32 %v47, %v80
    %v91 = vsub.f32 1.0, %v46
    %v92 = vsub.f32 1.0, %v47
    %v93 = vmul.f32 %v91, %v87
    %v94 = vmul.f32 %v92, %v88
    %v95 = vadd.f32 %v89, %v93
    %v96 = vadd.f32 %v90, %v94
    %v97 = vsub.f32 0.0, %v95
    %v98 = vsub.f32 0.0, %v96
    %v99 = vadd.f32 %v97, %v98
    %v100 = vrot.slane %v99, 4
    %v101 = vadd.f32 %v99, %v100
    %v102 = vrot.slane %v101, 2
    %v103 = vadd.f32 %v101, %v102
    %v104 = vrot.slane %v103, 1
    %v105 = vadd.f32 %v103, %v104
    %vm106 = vcmask 1040384
    %v107 = vsel %vm106, %v56, %v65
    %vm108 = vcmask 1041408
    %v109 = vsel %vm108, %v107, %v74
    %vm110 = vcmask 1042432
    %v111 = vsel %vm110, %v109, %v105
    %vm112 = vcmask 1043456
    %v113 = vsel %vm112, %v111, 0.0
    %114 = vst [vmem:[#allocation7] sm:$0xff] %v113
    // Predicated region
    $region18: #{tpu_custom_call.1} parent=1 // pred_check
      _
    $region19: #{tpu_custom_call.1} parent=1 // pred_check_branch
      %116 = sbr.rel (0) target = $region21
    $region20: #{tpu_custom_call.1} parent=1 // pred_region
      %118 = vsyncadd [#allocation4], 0
      %s120 = sshll.u32 [#allocation7], 4
      %s121 = int_to_ptr.vmem [resolvable:$true] %s120
      %s122 = sshll.u32 %s2, 4
      %s123 = int_to_ptr.hbm [resolvable:$true] %s122
      %125 = dma.vmem_to_hbm [thread:$0]  %s121, 128, %s123, [#allocation4]
    $region21: #{tpu_custom_call.1} parent=1 // pred_fallthru
      _
    // Predicated region
    $region22: #{tpu_custom_call.1} parent=1 // pred_check
      _
    $region23: #{tpu_custom_call.1} parent=1 // pred_check_branch
      %127 = sbr.rel (0) target = $region25
    $region24: #{tpu_custom_call.1} parent=1 // pred_region
      %129 = dma.done [#allocation4], 128
    $region25: #{tpu_custom_call.1} parent=1 // pred_fallthru
      _
    %130 = vsyncpa [#allocation3], 1
    %131 = vsyncpa [#allocation6], 1
    %132 = vsyncpa [#allocation4], 1

</llo_original>
